<compile_context>
chip_gen: v5e
topology: v5e:2x2
jax: 0.10.0
libtpu: 0.0.40
codegen_flags: <defaults>
</compile_context>

<pallas_src>
import functools

import jax
import jax.numpy as jnp
from jax.experimental import pallas as pl
from jax.experimental.pallas import tpu as pltpu


def _round_up(a, m):
    return (a + m - 1) // m * m


def encoder_kernel(x_ref, w1_ref, b1_ref, w2_ref, b2_ref, w3_ref, b3_ref, o_ref):
    # Cast of the streamed x tile to the compute dtype happens in-kernel
    # (free after the DMA); all accumulation is f32.
    x = x_ref[...].astype(w1_ref.dtype)
    # layer 1: Linear + ReLU
    h1 = jnp.dot(x, w1_ref[...], preferred_element_type=jnp.float32)
    h1 = jnp.maximum(h1 + b1_ref[...], 0.0)
    # layer 2: Linear + ReLU
    h2 = jnp.dot(h1.astype(w2_ref.dtype), w2_ref[...],
                 preferred_element_type=jnp.float32)
    h2 = jnp.maximum(h2 + b2_ref[...], 0.0)
    # layer 3: Linear + ReLU
    h3 = jnp.dot(h2.astype(w3_ref.dtype), w3_ref[...],
                 preferred_element_type=jnp.float32)
    h3 = jnp.maximum(h3 + b3_ref[...], 0.0)
    # Output dtype = x.dtype (reduced-precision writeback when x is bf16).
    o_ref[...] = h3.astype(o_ref.dtype)


def _pick_tile_b(B, tile_b, x_itemsize, D, Lp, H1p, H2p):
    """Batch tile: >=2 grid steps (v7x megacore), multiple of 16 (bf16 rows),
    and double-buffered streams kept well inside the smallest scoped-VMEM
    default (16 MiB on v5e)."""
    if B <= 16:
        return B  # single full-extent block (always a legal block shape)
    cap = _round_up(pl.cdiv(B, 2), 16)            # guarantee >= 2 grid steps
    tb = max(16, min(_round_up(tile_b, 16), cap))

    def est_bytes(t):
        # 2x double-buffered x tile + 2x double-buffered out tile + f32 intermediates
        return 2 * t * D * x_itemsize + 2 * t * Lp * x_itemsize \
            + t * (H1p + H2p) * 4

    while tb > 16 and est_bytes(tb) > 12 * 1024 * 1024:
        tb = max(16, _round_up(tb // 2, 16))
    return tb


@functools.partial(jax.jit, static_argnames=("tile_b", "use_bf16"))
def encoder_forward(x, params, *, tile_b=1024, use_bf16=True):
    """x: [B, input_size].  params: dict of w1,b1,w2,b2,w3,b3 (w as [in, out])."""
    w1, b1 = params["w1"], params["b1"]   # [D,  H1], [1, H1]
    w2, b2 = params["w2"], params["b2"]   # [H1, H2], [1, H2]
    w3, b3 = params["w3"], params["b3"]   # [H2, L ], [1, L ]

    B, D = x.shape
    H1, H2, L = w1.shape[1], w2.shape[1], w3.shape[1]

    # Pad only the (tiny, resident) weight output dims to multiples of 128 so
    # intermediates and output stores are lane-dense.  Exact: zero weight
    # columns + zero bias -> ReLU -> zero.  x itself is NOT padded/copied.
    H1p, H2p, Lp = (_round_up(d, 128) for d in (H1, H2, L))

    compute_dtype = jnp.bfloat16 if use_bf16 else jnp.float32

    def pad_w(w, rows, cols):
        return jnp.pad(w, ((0, rows - w.shape[0]),
                           (0, cols - w.shape[1]))).astype(compute_dtype)

    def pad_b(b, cols):
        return jnp.pad(b, ((0, 0), (0, cols - b.shape[1]))).astype(jnp.float32)

    w1p, b1p = pad_w(w1, D, H1p), pad_b(b1, H1p)
    w2p, b2p = pad_w(w2, H1p, H2p), pad_b(b2, H2p)
    w3p, b3p = pad_w(w3, H2p, Lp), pad_b(b3, Lp)

    x_itemsize = jnp.dtype(x.dtype).itemsize
    tb = _pick_tile_b(B, tile_b, x_itemsize, D, Lp, H1p, H2p)
    grid = (pl.cdiv(B, tb),)   # partial last tile handled by Pallas (rows independent)

    full = lambda shape: pl.BlockSpec(shape, lambda i: (0, 0))

    out = pl.pallas_call(
        encoder_kernel,
        out_shape=jax.ShapeDtypeStruct((B, Lp), x.dtype),
        grid=grid,
        in_specs=[
            pl.BlockSpec((tb, D), lambda i: (i, 0)),   # x tile (native dtype, no pad)
            full((D, H1p)), full((1, H1p)),            # layer 1 (resident)
            full((H1p, H2p)), full((1, H2p)),          # layer 2 (resident)
            full((H2p, Lp)), full((1, Lp)),            # layer 3 (resident)
        ],
        out_specs=pl.BlockSpec((tb, Lp), lambda i: (i, 0)),   # lane-dense stores
        compiler_params=pltpu.CompilerParams(
            dimension_semantics=("parallel",),
        ),
    )(x, w1p, b1p, w2p, b2p, w3p, b3p)

    return out if Lp == L else out[:, :L]


def init_params(key, input_size, latent_size, dtype=jnp.float32):
    """Mimics nn.Linear's U(-1/sqrt(fan_in), 1/sqrt(fan_in)) init."""
    h1 = input_size // 2
    h2 = input_size // 4
    dims = [(input_size, h1), (h1, h2), (h2, latent_size)]
    params = {}
    keys = jax.random.split(key, 6)
    for idx, (fan_in, fan_out) in enumerate(dims, start=1):
        bound = 1.0 / (fan_in ** 0.5)
        # stored as [in, out] so the kernel computes x @ W directly
        params[f"w{idx}"] = jax.random.uniform(
            keys[2 * idx - 2], (fan_in, fan_out), dtype, minval=-bound, maxval=bound
        )
        params[f"b{idx}"] = jax.random.uniform(
            keys[2 * idx - 1], (1, fan_out), dtype, minval=-bound, maxval=bound
        )
    return params


def encoder_ref(x, params):
    h = jnp.maximum(x @ params["w1"] + params["b1"], 0.0)
    h = jnp.maximum(h @ params["w2"] + params["b2"], 0.0)
    h = jnp.maximum(h @ params["w3"] + params["b3"], 0.0)
    return h


if __name__ == "__main__":
    key = jax.random.PRNGKey(0)
    k_p, k1, k2, k3 = jax.random.split(key, 4)

    input_size = 256
    latent_size = 32
    params = init_params(k_p, input_size, latent_size)

    # Case 1: f32 path (strict check), batch tiles into 2 grid steps.
    x = jax.random.normal(k1, (64, input_size), dtype=jnp.float32)
    out = jax.block_until_ready(encoder_forward(x, params, use_bf16=False))
    ref = encoder_ref(x, params)
    assert out.shape == (64, latent_size) and out.dtype == x.dtype
    assert jnp.allclose(out, ref, atol=1e-4, rtol=1e-4), "f32 mismatch vs reference"

    # Case 2: ragged tiny batch (B=13) — single full-extent tile, no padding copy.
    x2 = jax.random.normal(k2, (13, input_size), dtype=jnp.float32)
    out2 = jax.block_until_ready(encoder_forward(x2, params, use_bf16=False))
    ref2 = encoder_ref(x2, params)
    assert out2.shape == (13, latent_size)
    assert jnp.allclose(out2, ref2, atol=1e-4, rtol=1e-4), "ragged-batch mismatch"

    # Case 3: default reduced-precision I/O path — bf16 x in / bf16 out,
    # B=300 exercises a partial last batch tile (grid=2).
    x3 = jax.random.normal(k3, (300, input_size), dtype=jnp.float32).astype(jnp.bfloat16)
    out3 = jax.block_until_ready(encoder_forward(x3, params))
    ref3 = encoder_ref(x3.astype(jnp.float32), params)
    assert out3.shape == (300, latent_size) and out3.dtype == jnp.bfloat16
    assert jnp.allclose(out3.astype(jnp.float32), ref3, atol=1e-1, rtol=1e-1), \
        "bf16 mismatch"

    print("KERNEL_OK")
</pallas_src>

<mosaic_0001>
module attributes {stable_mosaic.version = 11 : i64} {
  func.func @encoder_kernel(%arg0: i32, %arg1: memref<32x256xf32, #tpu.memory_space<vmem>>, %arg2: memref<256x128xf32, #tpu.memory_space<vmem>>, %arg3: memref<1x128xf32, #tpu.memory_space<vmem>>, %arg4: memref<128x128xf32, #tpu.memory_space<vmem>>, %arg5: memref<1x128xf32, #tpu.memory_space<vmem>>, %arg6: memref<128x128xf32, #tpu.memory_space<vmem>>, %arg7: memref<1x128xf32, #tpu.memory_space<vmem>>, %arg8: memref<32x128xf32, #tpu.memory_space<vmem>>) attributes {dimension_semantics = [#tpu.dimension_semantics<parallel>], iteration_bounds = array<i64: 2>, scalar_prefetch = 0 : i64, scratch_operands = 0 : i64, tpu.core_type = #tpu.core_type<tc>, window_params = [{transform_indices = @transform_0, window_bounds = array<i64: 32, 256>}, {pipeline_mode = #tpu.pipeline_mode<synchronous>, transform_indices = @transform_1, window_bounds = array<i64: 256, 128>}, {pipeline_mode = #tpu.pipeline_mode<synchronous>, transform_indices = @transform_2, window_bounds = array<i64: 1, 128>}, {pipeline_mode = #tpu.pipeline_mode<synchronous>, transform_indices = @transform_3, window_bounds = array<i64: 128, 128>}, {pipeline_mode = #tpu.pipeline_mode<synchronous>, transform_indices = @transform_4, window_bounds = array<i64: 1, 128>}, {pipeline_mode = #tpu.pipeline_mode<synchronous>, transform_indices = @transform_5, window_bounds = array<i64: 128, 128>}, {pipeline_mode = #tpu.pipeline_mode<synchronous>, transform_indices = @transform_6, window_bounds = array<i64: 1, 128>}, {transform_indices = @transform_7, window_bounds = array<i64: 32, 128>}]} {
    %c0 = arith.constant 0 : index
    %c0_0 = arith.constant 0 : index
    %0 = vector.load %arg1[%c0, %c0_0] : memref<32x256xf32, #tpu.memory_space<vmem>>, vector<32x256xf32>
    %c0_1 = arith.constant 0 : index
    %c0_2 = arith.constant 0 : index
    %1 = vector.load %arg2[%c0_1, %c0_2] : memref<256x128xf32, #tpu.memory_space<vmem>>, vector<256x128xf32>
    %cst = arith.constant dense<0.000000e+00> : vector<32x128xf32>
    %2 = tpu.matmul %0, %1, %cst {dimension_numbers = #tpu.dot_dimension_numbers<[1], [0], [0], [1], [0, 0, 1, 1], [], []>} : vector<32x256xf32>, vector<256x128xf32>, vector<32x128xf32> -> vector<32x128xf32>
    %c0_3 = arith.constant 0 : index
    %c0_4 = arith.constant 0 : index
    %3 = vector.load %arg3[%c0_3, %c0_4] : memref<1x128xf32, #tpu.memory_space<vmem>>, vector<1x128xf32>
    %4 = vector.broadcast %3 : vector<1x128xf32> to vector<32x128xf32>
    %5 = arith.addf %2, %4 : vector<32x128xf32>
    %cst_5 = arith.constant 0.000000e+00 : f32
    %6 = vector.broadcast %cst_5 : f32 to vector<32x128xf32>
    %7 = arith.maximumf %5, %6 : vector<32x128xf32>
    %c0_6 = arith.constant 0 : index
    %c0_7 = arith.constant 0 : index
    %8 = vector.load %arg4[%c0_6, %c0_7] : memref<128x128xf32, #tpu.memory_space<vmem>>, vector<128x128xf32>
    %cst_8 = arith.constant dense<0.000000e+00> : vector<32x128xf32>
    %9 = tpu.matmul %7, %8, %cst_8 {dimension_numbers = #tpu.dot_dimension_numbers<[1], [0], [0], [1], [0, 0, 1, 1], [], []>} : vector<32x128xf32>, vector<128x128xf32>, vector<32x128xf32> -> vector<32x128xf32>
    %c0_9 = arith.constant 0 : index
    %c0_10 = arith.constant 0 : index
    %10 = vector.load %arg5[%c0_9, %c0_10] : memref<1x128xf32, #tpu.memory_space<vmem>>, vector<1x128xf32>
    %11 = vector.broadcast %10 : vector<1x128xf32> to vector<32x128xf32>
    %12 = arith.addf %9, %11 : vector<32x128xf32>
    %cst_11 = arith.constant 0.000000e+00 : f32
    %13 = vector.broadcast %cst_11 : f32 to vector<32x128xf32>
    %14 = arith.maximumf %12, %13 : vector<32x128xf32>
    %c0_12 = arith.constant 0 : index
    %c0_13 = arith.constant 0 : index
    %15 = vector.load %arg6[%c0_12, %c0_13] : memref<128x128xf32, #tpu.memory_space<vmem>>, vector<128x128xf32>
    %cst_14 = arith.constant dense<0.000000e+00> : vector<32x128xf32>
    %16 = tpu.matmul %14, %15, %cst_14 {dimension_numbers = #tpu.dot_dimension_numbers<[1], [0], [0], [1], [0, 0, 1, 1], [], []>} : vector<32x128xf32>, vector<128x128xf32>, vector<32x128xf32> -> vector<32x128xf32>
    %c0_15 = arith.constant 0 : index
    %c0_16 = arith.constant 0 : index
    %17 = vector.load %arg7[%c0_15, %c0_16] : memref<1x128xf32, #tpu.memory_space<vmem>>, vector<1x128xf32>
    %18 = vector.broadcast %17 : vector<1x128xf32> to vector<32x128xf32>
    %19 = arith.addf %16, %18 : vector<32x128xf32>
    %cst_17 = arith.constant 0.000000e+00 : f32
    %20 = vector.broadcast %cst_17 : f32 to vector<32x128xf32>
    %21 = arith.maximumf %19, %20 : vector<32x128xf32>
    %c0_18 = arith.constant 0 : index
    %c0_19 = arith.constant 0 : index
    %22 = vector.load %arg8[%c0_18, %c0_19] : memref<32x128xf32, #tpu.memory_space<vmem>>, vector<32x128xf32>
    tpu.vector_store %arg8[%c0_18, %c0_19], %21 {strides = array<i32>} : memref<32x128xf32, #tpu.memory_space<vmem>>, vector<32x128xf32>,
    return
  }
  func.func @transform_0(%arg0: i32) -> (i32, i32) {
    %c0_i32 = arith.constant 0 : i32
    %c0_i32_0 = arith.constant 0 : i32
    return %arg0, %c0_i32 : i32, i32
  }
  func.func @transform_1(%arg0: i32) -> (i32, i32) {
    %c0_i32 = arith.constant 0 : i32
    %c0_i32_0 = arith.constant 0 : i32
    %c0_i32_1 = arith.constant 0 : i32
    return %c0_i32, %c0_i32_0 : i32, i32
  }
  func.func @transform_2(%arg0: i32) -> (i32, i32) {
    %c0_i32 = arith.constant 0 : i32
    %c0_i32_0 = arith.constant 0 : i32
    %c0_i32_1 = arith.constant 0 : i32
    return %c0_i32, %c0_i32_0 : i32, i32
  }
  func.func @transform_3(%arg0: i32) -> (i32, i32) {
    %c0_i32 = arith.constant 0 : i32
    %c0_i32_0 = arith.constant 0 : i32
    %c0_i32_1 = arith.constant 0 : i32
    return %c0_i32, %c0_i32_0 : i32, i32
  }
  func.func @transform_4(%arg0: i32) -> (i32, i32) {
    %c0_i32 = arith.constant 0 : i32
    %c0_i32_0 = arith.constant 0 : i32
    %c0_i32_1 = arith.constant 0 : i32
    return %c0_i32, %c0_i32_0 : i32, i32
  }
  func.func @transform_5(%arg0: i32) -> (i32, i32) {
    %c0_i32 = arith.constant 0 : i32
    %c0_i32_0 = arith.constant 0 : i32
    %c0_i32_1 = arith.constant 0 : i32
    return %c0_i32, %c0_i32_0 : i32, i32
  }
  func.func @transform_6(%arg0: i32) -> (i32, i32) {
    %c0_i32 = arith.constant 0 : i32
    %c0_i32_0 = arith.constant 0 : i32
    %c0_i32_1 = arith.constant 0 : i32
    return %c0_i32, %c0_i32_0 : i32, i32
  }
  func.func @transform_7(%arg0: i32) -> (i32, i32) {
    %c0_i32 = arith.constant 0 : i32
    %c0_i32_0 = arith.constant 0 : i32
    return %arg0, %c0_i32 : i32, i32
  }
}

</mosaic_0001>

<llo_original>
// kernel: encoder_forward.1
$region0: #{encoder_forward.1}
  #allocation0 [shape = 'u32[]', space=smem, size = 0x4, offset = 0x4, fixed_abs, tag = 'smem constant byte address 0x4 - core index']
  #allocation1 [shape = 'u32[72,128]{1,0:T(1,128)}', space=vmem, size = 0x9000, scoped, tag = 'internal scratch']
  %s0 = inlined_call_operand.vmem [shape: f32[64,256], index: 0, kind: input, shape index: {}]
  %s1 = inlined_call_operand.vmem [shape: f32[256,128], index: 1, kind: input, shape index: {}]
  %s2 = inlined_call_operand.vmem [shape: f32[1,128], index: 2, kind: input, shape index: {}]
  %s3 = inlined_call_operand.vmem [shape: f32[128,128], index: 3, kind: input, shape index: {}]
  %s4 = inlined_call_operand.vmem [shape: f32[1,128], index: 4, kind: input, shape index: {}]
  %s5 = inlined_call_operand.vmem [shape: f32[128,128], index: 5, kind: input, shape index: {}]
  %s6 = inlined_call_operand.vmem [shape: f32[1,128], index: 6, kind: input, shape index: {}]
  %s7 = inlined_call_operand.vmem [shape: f32[64,128], index: 7, kind: output, shape index: {}]
  %s8 = sld [smem:[#allocation0]]
  $region61: #{encoder_forward.1} parent=0
    _
  %s10 = ssub.s32 1, %s8
  %s11 = scalar_select 0, %s10, %s8
  loop: start=0, step=1, limit=4
  $region2: #{encoder_forward.1} parent=0 // loop_pre_header
    _
  $region3: #{encoder_forward.1} parent=0 // loop_header
    %s13 = sphi 0, %s17
    %p14 = scmp.ge.s32.totalorder %s13, 4
    %s23 = sphi 0, %s25
    %s26 = sphi 0, %s23
    %s27 = sphi 0, %s26
    %s43 = sphi 0, %s27
    %s47 = sphi 0, %s47
    %s49 = sphi 0, %s47
    %s50 = sphi 0, %s49
    %s64 = sphi 0, %s50
    %s68 = sphi 0, %s68
    %s70 = sphi 0, %s68
    %s71 = sphi 0, %s70
    %s85 = sphi 0, %s71
    %s89 = sphi 0, %s89
    %s91 = sphi 0, %s89
    %s92 = sphi 0, %s91
    %s106 = sphi 0, %s92
    %s110 = sphi 0, %s110
    %s112 = sphi 0, %s110
    %s113 = sphi 0, %s112
    %s127 = sphi 0, %s113
    %s131 = sphi 0, %s131
    %s133 = sphi 0, %s131
    %s134 = sphi 0, %s133
    %s148 = sphi 0, %s134
    %s152 = sphi 0, %s152
    %s154 = sphi 0, %s152
    %s155 = sphi 0, %s154
    %s169 = sphi 0, %s155
    %s175 = sphi 0, %s177
    %s178 = sphi 0, %s175
    %s179 = sphi 0, %s178
    %s195 = sphi 0, %s179
  $region4: #{encoder_forward.1} parent=0 // loop_header_branch
    %16 = sbr.rel (%p14) target = $region8
  $region5: #{encoder_forward.1} parent=0 // loop_body
    %s18 = ssub.s32 %s13, 1
    %s19 = ssub.s32 %s13, 2
    %s20 = sadd.s32 %s13, 1
    %s21 = ssub.s32 %s13, %s20
    %p22 = scmp.eq.s32.totalorder %s21, 0
    %s24 = sadd.s32 %s23, 1
    %s25 = scalar_select %p22, %s23, %s24
    %p28 = pneg %p22
    %p29 = scmp.eq.s32.totalorder %s13, 1
    %p30 = por %p28, %p29
    %p31 = scmp.ne.s32.totalorder %s23, %s26
    %p32 = scmp.eq.s32.totalorder %s13, 0
    %p33 = por %p31, %p32
    %p34 = scmp.ne.s32.totalorder %s23, %s26
    %p35 = scmp.eq.s32.totalorder %s18, 1
    %p36 = por %p34, %p35
    %p37 = scmp.ne.s32.totalorder %s26, %s27
    %p38 = scmp.eq.s32.totalorder %s18, 0
    %p39 = por %p37, %p38
    %p40 = scmp.ne.s32.totalorder %s26, %s27
    %p41 = scmp.eq.s32.totalorder %s19, 1
    %p42 = por %p40, %p41
    %p44 = scmp.ne.s32.totalorder %s27, %s43
    %p45 = scmp.eq.s32.totalorder %s19, 0
    %p46 = por %p44, %p45
    %s48 = sadd.s32 %s47, 1
    %p51 = scmp.eq.s32.totalorder %s13, 1
    %p52 = scmp.ne.s32.totalorder %s47, %s49
    %p53 = scmp.eq.s32.totalorder %s13, 0
    %p54 = por %p52, %p53
    %p55 = scmp.ne.s32.totalorder %s47, %s49
    %p56 = scmp.eq.s32.totalorder %s18, 1
    %p57 = por %p55, %p56
    %p58 = scmp.ne.s32.totalorder %s49, %s50
    %p59 = scmp.eq.s32.totalorder %s18, 0
    %p60 = por %p58, %p59
    %p61 = scmp.ne.s32.totalorder %s49, %s50
    %p62 = scmp.eq.s32.totalorder %s19, 1
    %p63 = por %p61, %p62
    %p65 = scmp.ne.s32.totalorder %s50, %s64
    %p66 = scmp.eq.s32.totalorder %s19, 0
    %p67 = por %p65, %p66
    %s69 = sadd.s32 %s68, 1
    %p72 = scmp.eq.s32.totalorder %s13, 1
    %p73 = scmp.ne.s32.totalorder %s68, %s70
    %p74 = scmp.eq.s32.totalorder %s13, 0
    %p75 = por %p73, %p74
    %p76 = scmp.ne.s32.totalorder %s68, %s70
    %p77 = scmp.eq.s32.totalorder %s18, 1
    %p78 = por %p76, %p77
    %p79 = scmp.ne.s32.totalorder %s70, %s71
    %p80 = scmp.eq.s32.totalorder %s18, 0
    %p81 = por %p79, %p80
    %p82 = scmp.ne.s32.totalorder %s70, %s71
    %p83 = scmp.eq.s32.totalorder %s19, 1
    %p84 = por %p82, %p83
    %p86 = scmp.ne.s32.totalorder %s71, %s85
    %p87 = scmp.eq.s32.totalorder %s19, 0
    %p88 = por %p86, %p87
    %s90 = sadd.s32 %s89, 1
    %p93 = scmp.eq.s32.totalorder %s13, 1
    %p94 = scmp.ne.s32.totalorder %s89, %s91
    %p95 = scmp.eq.s32.totalorder %s13, 0
    %p96 = por %p94, %p95
    %p97 = scmp.ne.s32.totalorder %s89, %s91
    %p98 = scmp.eq.s32.totalorder %s18, 1
    %p99 = por %p97, %p98
    %p100 = scmp.ne.s32.totalorder %s91, %s92
    %p101 = scmp.eq.s32.totalorder %s18, 0
    %p102 = por %p100, %p101
    %p103 = scmp.ne.s32.totalorder %s91, %s92
    %p104 = scmp.eq.s32.totalorder %s19, 1
    %p105 = por %p103, %p104
    %p107 = scmp.ne.s32.totalorder %s92, %s106
    %p108 = scmp.eq.s32.totalorder %s19, 0
    %p109 = por %p107, %p108
    %s111 = sadd.s32 %s110, 1
    %p114 = scmp.eq.s32.totalorder %s13, 1
    %p115 = scmp.ne.s32.totalorder %s110, %s112
    %p116 = scmp.eq.s32.totalorder %s13, 0
    %p117 = por %p115, %p116
    %p118 = scmp.ne.s32.totalorder %s110, %s112
    %p119 = scmp.eq.s32.totalorder %s18, 1
    %p120 = por %p118, %p119
    %p121 = scmp.ne.s32.totalorder %s112, %s113
    %p122 = scmp.eq.s32.totalorder %s18, 0
    %p123 = por %p121, %p122
    %p124 = scmp.ne.s32.totalorder %s112, %s113
    %p125 = scmp.eq.s32.totalorder %s19, 1
    %p126 = por %p124, %p125
    %p128 = scmp.ne.s32.totalorder %s113, %s127
    %p129 = scmp.eq.s32.totalorder %s19, 0
    %p130 = por %p128, %p129
    %s132 = sadd.s32 %s131, 1
    %p135 = scmp.eq.s32.totalorder %s13, 1
    %p136 = scmp.ne.s32.totalorder %s131, %s133
    %p137 = scmp.eq.s32.totalorder %s13, 0
    %p138 = por %p136, %p137
    %p139 = scmp.ne.s32.totalorder %s131, %s133
    %p140 = scmp.eq.s32.totalorder %s18, 1
    %p141 = por %p139, %p140
    %p142 = scmp.ne.s32.totalorder %s133, %s134
    %p143 = scmp.eq.s32.totalorder %s18, 0
    %p144 = por %p142, %p143
    %p145 = scmp.ne.s32.totalorder %s133, %s134
    %p146 = scmp.eq.s32.totalorder %s19, 1
    %p147 = por %p145, %p146
    %p149 = scmp.ne.s32.totalorder %s134, %s148
    %p150 = scmp.eq.s32.totalorder %s19, 0
    %p151 = por %p149, %p150
    %s153 = sadd.s32 %s152, 1
    %p156 = scmp.eq.s32.totalorder %s13, 1
    %p157 = scmp.ne.s32.totalorder %s152, %s154
    %p158 = scmp.eq.s32.totalorder %s13, 0
    %p159 = por %p157, %p158
    %p160 = scmp.ne.s32.totalorder %s152, %s154
    %p161 = scmp.eq.s32.totalorder %s18, 1
    %p162 = por %p160, %p161
    %p163 = scmp.ne.s32.totalorder %s154, %s155
    %p164 = scmp.eq.s32.totalorder %s18, 0
    %p165 = por %p163, %p164
    %p166 = scmp.ne.s32.totalorder %s154, %s155
    %p167 = scmp.eq.s32.totalorder %s19, 1
    %p168 = por %p166, %p167
    %p170 = scmp.ne.s32.totalorder %s155, %s169
    %p171 = scmp.eq.s32.totalorder %s19, 0
    %p172 = por %p170, %p171
    %s173 = ssub.s32 %s13, %s20
    %p174 = scmp.eq.s32.totalorder %s173, 0
    %s176 = sadd.s32 %s175, 1
    %s177 = scalar_select %p174, %s175, %s176
    %p180 = pneg %p174
    %p181 = scmp.eq.s32.totalorder %s13, 1
    %p182 = por %p180, %p181
    %p183 = scmp.ne.s32.totalorder %s175, %s178
    %p184 = scmp.eq.s32.totalorder %s13, 0
    %p185 = por %p183, %p184
    %p186 = scmp.ne.s32.totalorder %s175, %s178
    %p187 = scmp.eq.s32.totalorder %s18, 1
    %p188 = por %p186, %p187
    %p189 = scmp.ne.s32.totalorder %s178, %s179
    %p190 = scmp.eq.s32.totalorder %s18, 0
    %p191 = por %p189, %p190
    %p192 = scmp.ne.s32.totalorder %s178, %s179
    %p193 = scmp.eq.s32.totalorder %s19, 1
    %p194 = por %p192, %p193
    %p196 = scmp.ne.s32.totalorder %s179, %s195
    %p197 = scmp.eq.s32.totalorder %s19, 0
    %p198 = por %p196, %p197
    %p199 = scmp.le.s32.totalorder 1, %s13
    %p200 = scmp.lt.s32.totalorder %s13, 3
    %p201 = pnand %p199, %p200
    %p202 = pneg %p201
    // Predicated region
    $region9: #{encoder_forward.1} parent=5 // pred_check
      _
    $region10: #{encoder_forward.1} parent=5 // pred_check_branch
      %204 = sbr.rel (%p201) target = $region12
    $region11: #{encoder_forward.1} parent=5 // pred_region
      %s205 = ssub.s32 %s13, 1
      // Predicated region
      $region13: #{encoder_forward.1} parent=11 // pred_check
        %p206 = pneg %p60
      $region14: #{encoder_forward.1} parent=11 // pred_check_branch
        %208 = sbr.rel (%p206) target = $region16
      $region15: #{encoder_forward.1} parent=11 // pred_region
        _
      $region16: #{encoder_forward.1} parent=11 // pred_fallthru
        _
      // Predicated region
      $region17: #{encoder_forward.1} parent=11 // pred_check
        %p209 = pneg %p81
      $region18: #{encoder_forward.1} parent=11 // pred_check_branch
        %211 = sbr.rel (%p209) target = $region20
      $region19: #{encoder_forward.1} parent=11 // pred_region
        _
      $region20: #{encoder_forward.1} parent=11 // pred_fallthru
        _
      // Predicated region
      $region21: #{encoder_forward.1} parent=11 // pred_check
        %p212 = pneg %p102
      $region22: #{encoder_forward.1} parent=11 // pred_check_branch
        %214 = sbr.rel (%p212) target = $region24
      $region23: #{encoder_forward.1} parent=11 // pred_region
        _
      $region24: #{encoder_forward.1} parent=11 // pred_fallthru
        _
      // Predicated region
      $region25: #{encoder_forward.1} parent=11 // pred_check
        %p215 = pneg %p123
      $region26: #{encoder_forward.1} parent=11 // pred_check_branch
        %217 = sbr.rel (%p215) target = $region28
      $region27: #{encoder_forward.1} parent=11 // pred_region
        _
      $region28: #{encoder_forward.1} parent=11 // pred_fallthru
        _
      // Predicated region
      $region29: #{encoder_forward.1} parent=11 // pred_check
        %p218 = pneg %p144
      $region30: #{encoder_forward.1} parent=11 // pred_check_branch
        %220 = sbr.rel (%p218) target = $region32
      $region31: #{encoder_forward.1} parent=11 // pred_region
        _
      $region32: #{encoder_forward.1} parent=11 // pred_fallthru
        _
      // Predicated region
      $region33: #{encoder_forward.1} parent=11 // pred_check
        %p221 = pneg %p165
      $region34: #{encoder_forward.1} parent=11 // pred_check_branch
        %223 = sbr.rel (%p221) target = $region36
      $region35: #{encoder_forward.1} parent=11 // pred_region
        _
      $region36: #{encoder_forward.1} parent=11 // pred_fallthru
        _
    $region12: #{encoder_forward.1} parent=5 // pred_fallthru
      _
    %p224 = scmp.lt.s32.totalorder %s13, 2
    // Predicated region
    $region37: #{encoder_forward.1} parent=5 // pred_check
      %p225 = pneg %p224
    $region38: #{encoder_forward.1} parent=5 // pred_check_branch
      %227 = sbr.rel (%p225) target = $region40
    $region39: #{encoder_forward.1} parent=5 // pred_region
      // Predicated region
      $region41: #{encoder_forward.1} parent=39 // pred_check
        %p228 = pneg %p33
      $region42: #{encoder_forward.1} parent=39 // pred_check_branch
        %230 = sbr.rel (%p228) target = $region44
      $region43: #{encoder_forward.1} parent=39 // pred_region
        %s231 = smul.u32 4, %s13
        %p232 = scmp.lt.s32.totalorder %s231, 7
        %s233 = scalar_select %p232, %s231, 7
        %s234 = smul.addr %s233, 2
        %s235 = smul.addr %s234, 8
        %s236 = scalar_lea.vmem %s0, %s235
        %s237 = smul.u32 4, %s13
      $region44: #{encoder_forward.1} parent=39 // pred_fallthru
        _
    $region40: #{encoder_forward.1} parent=5 // pred_fallthru
      _
    %p238 = scmp.le.s32.totalorder 1, %s13
    %p239 = scmp.lt.s32.totalorder %s13, 3
    %p240 = pnand %p238, %p239
    %p241 = pneg %p240
    // Predicated region
    $region45: #{encoder_forward.1} parent=5 // pred_check
      _
    $region46: #{encoder_forward.1} parent=5 // pred_check_branch
      %243 = sbr.rel (%p240) target = $region48
    $region47: #{encoder_forward.1} parent=5 // pred_region
      %s244 = ssub.s32 %s13, 1
      %s245 = smul.u32 4, %s18
      %p246 = scmp.lt.s32.totalorder %s245, 7
      %s247 = scalar_select %p246, %s245, 7
      %s248 = smul.addr %s247, 2
      %s249 = smul.addr %s248, 8
      %s250 = scalar_lea.vmem %s0, %s249
      %p251 = pneg %p39
      %p252 = pneg %p36
      %p253 = pneg %p60
      %p254 = pneg %p57
      %p255 = pneg %p81
      %p256 = pneg %p78
      %p257 = pneg %p102
      %p258 = pneg %p99
      %p259 = pneg %p123
      %p260 = pneg %p120
      %p261 = pneg %p144
      %p262 = pneg %p141
      %p263 = pneg %p165
      %p264 = pneg %p162
      %p265 = pneg %p191
      %p266 = pneg %p188
      %s267 = smul.u32 4, %s18
      %p268 = scmp.lt.s32.totalorder %s267, 7
      %s269 = scalar_select %p268, %s267, 7
      %s270 = smul.addr %s269, 8
      %s271 = scalar_lea.vmem %s7, %s270
      %s272 = smul.u32 4, %s18
      %p273 = scmp.lt.s32.totalorder %s272, 7
      %s274 = scalar_select %p273, %s272, 7
      %s275 = smul.addr %s274, 2
      %s276 = smul.addr %s275, 8
      %s277 = scalar_lea.vmem %s0, %s276
      %s278 = smul.u32 4, %s18
      %s279 = smul.u32 4, %s18
      %p280 = scmp.lt.s32.totalorder %s279, 7
      %s281 = scalar_select %p280, %s279, 7
      %s282 = smul.addr %s281, 8
      %s283 = scalar_lea.vmem %s7, %s282
      %s284 = smul.u32 4, %s18
      %v285 = vld [vmem:[%s277] sm:$0xff]
      %v286 = vld [vmem:[%s277 + $0x8] sm:$0xff]
      %v287 = vld [vmem:[%s277 + $0x10] sm:$0xff]
      %v288 = vld [vmem:[%s277 + $0x18] sm:$0xff]
      %v289 = vld [vmem:[%s277 + $0x20] sm:$0xff]
      %v290 = vld [vmem:[%s277 + $0x28] sm:$0xff]
      %v291 = vld [vmem:[%s277 + $0x30] sm:$0xff]
      %v292 = vld [vmem:[%s277 + $0x38] sm:$0xff]
      %v293 = vld [vmem:[%s1] sm:$0xff]
      %v294 = vld [vmem:[%s1 + $0x8] sm:$0xff]
      %v295 = vld [vmem:[%s1 + $0x10] sm:$0xff]
      %v296 = vld [vmem:[%s1 + $0x18] sm:$0xff]
      %v297 = vld [vmem:[%s1 + $0x20] sm:$0xff]
      %v298 = vld [vmem:[%s1 + $0x28] sm:$0xff]
      %v299 = vld [vmem:[%s1 + $0x30] sm:$0xff]
      %v300 = vld [vmem:[%s1 + $0x38] sm:$0xff]
      %v301 = vld [vmem:[%s1 + $0x40] sm:$0xff]
      %v302 = vld [vmem:[%s1 + $0x48] sm:$0xff]
      %v303 = vld [vmem:[%s1 + $0x50] sm:$0xff]
      %v304 = vld [vmem:[%s1 + $0x58] sm:$0xff]
      %v305 = vld [vmem:[%s1 + $0x60] sm:$0xff]
      %v306 = vld [vmem:[%s1 + $0x68] sm:$0xff]
      %v307 = vld [vmem:[%s1 + $0x70] sm:$0xff]
      %v308 = vld [vmem:[%s1 + $0x78] sm:$0xff]
      %v309 = vld [vmem:[%s1 + $0x80] sm:$0xff]
      %v310 = vld [vmem:[%s1 + $0x88] sm:$0xff]
      %v311 = vld [vmem:[%s1 + $0x90] sm:$0xff]
      %v312 = vld [vmem:[%s1 + $0x98] sm:$0xff]
      %v313 = vld [vmem:[%s1 + $0xa0] sm:$0xff]
      %v314 = vld [vmem:[%s1 + $0xa8] sm:$0xff]
      %v315 = vld [vmem:[%s1 + $0xb0] sm:$0xff]
      %v316 = vld [vmem:[%s1 + $0xb8] sm:$0xff]
      %v317 = vld [vmem:[%s1 + $0xc0] sm:$0xff]
      %v318 = vld [vmem:[%s1 + $0xc8] sm:$0xff]
      %v319 = vld [vmem:[%s1 + $0xd0] sm:$0xff]
      %v320 = vld [vmem:[%s1 + $0xd8] sm:$0xff]
      %v321 = vld [vmem:[%s1 + $0xe0] sm:$0xff]
      %v322 = vld [vmem:[%s1 + $0xe8] sm:$0xff]
      %v323 = vld [vmem:[%s1 + $0xf0] sm:$0xff]
      %v324 = vld [vmem:[%s1 + $0xf8] sm:$0xff]
      %v325 = vld [vmem:[%s2] sm:$0x1]
      %v327 = vperm.slane %v325, 0
      %329 = vmatpush.msra.mxu0 %v308
      %330 = vmatpush.msra.mxu0 %v307
      %331 = vmatpush.msra.mxu0 %v306
      %332 = vmatpush.msra.mxu0 %v305
      %333 = vmatpush.msra.mxu0 %v304
      %334 = vmatpush.msra.mxu0 %v303
      %335 = vmatpush.msra.mxu0 %v302
      %336 = vmatpush.msra.mxu0 %v301
      %337 = vmatpush.msra.mxu0 %v300
      %338 = vmatpush.msra.mxu0 %v299
      %339 = vmatpush.msra.mxu0 %v298
      %340 = vmatpush.msra.mxu0 %v297
      %341 = vmatpush.msra.mxu0 %v296
      %342 = vmatpush.msra.mxu0 %v295
      %343 = vmatpush.msra.mxu0 %v294
      %344 = vmatpush.msra.mxu0 %v293
      %345 = vmatmul.f32.gmra.mxu0 %v285
      %v346 = vpop.f32.mrf.mxu0
      %v347 = vadd.f32 %v327, %v346
      %348 = vmatmul.f32.gmra.mxu0 %v287
      %v349 = vpop.f32.mrf.mxu0
      %v350 = vadd.f32 %v327, %v349
      %351 = vmatmul.f32.gmra.mxu0 %v289
      %v352 = vpop.f32.mrf.mxu0
      %v353 = vadd.f32 %v327, %v352
      %354 = vmatmul.f32.gmra.mxu0 %v291
      %v355 = vpop.f32.mrf.mxu0
      %v356 = vadd.f32 %v327, %v355
      %357 = vdwg.mxu0
      %358 = vmatpush.msra.mxu0 %v324
      %359 = vmatpush.msra.mxu0 %v323
      %360 = vmatpush.msra.mxu0 %v322
      %361 = vmatpush.msra.mxu0 %v321
      %362 = vmatpush.msra.mxu0 %v320
      %363 = vmatpush.msra.mxu0 %v319
      %364 = vmatpush.msra.mxu0 %v318
      %365 = vmatpush.msra.mxu0 %v317
      %366 = vmatpush.msra.mxu0 %v316
      %367 = vmatpush.msra.mxu0 %v315
      %368 = vmatpush.msra.mxu0 %v314
      %369 = vmatpush.msra.mxu0 %v313
      %370 = vmatpush.msra.mxu0 %v312
      %371 = vmatpush.msra.mxu0 %v311
      %372 = vmatpush.msra.mxu0 %v310
      %373 = vmatpush.msra.mxu0 %v309
      %374 = vmatmul.f32.gmra.mxu0 %v286
      %v375 = vpop.f32.mrf.mxu0
      %v376 = vadd.f32 %v347, %v375
      %377 = vmatmul.f32.gmra.mxu0 %v288
      %v378 = vpop.f32.mrf.mxu0
      %v379 = vadd.f32 %v350, %v378
      %380 = vmatmul.f32.gmra.mxu0 %v290
      %v381 = vpop.f32.mrf.mxu0
      %v382 = vadd.f32 %v353, %v381
      %383 = vmatmul.f32.gmra.mxu0 %v292
      %v384 = vpop.f32.mrf.mxu0
      %v385 = vadd.f32 %v356, %v384
      %386 = vdwg.mxu0
      %v387 = vmax.f32 %v376, 0.0
      %v388 = vmax.f32 %v379, 0.0
      %v389 = vmax.f32 %v382, 0.0
      %v390 = vmax.f32 %v385, 0.0
      %v391 = vld [vmem:[%s3] sm:$0xff]
      %v392 = vld [vmem:[%s3 + $0x8] sm:$0xff]
      %v393 = vld [vmem:[%s3 + $0x10] sm:$0xff]
      %v394 = vld [vmem:[%s3 + $0x18] sm:$0xff]
      %v395 = vld [vmem:[%s3 + $0x20] sm:$0xff]
      %v396 = vld [vmem:[%s3 + $0x28] sm:$0xff]
      %v397 = vld [vmem:[%s3 + $0x30] sm:$0xff]
      %v398 = vld [vmem:[%s3 + $0x38] sm:$0xff]
      %v399 = vld [vmem:[%s3 + $0x40] sm:$0xff]
      %v400 = vld [vmem:[%s3 + $0x48] sm:$0xff]
      %v401 = vld [vmem:[%s3 + $0x50] sm:$0xff]
      %v402 = vld [vmem:[%s3 + $0x58] sm:$0xff]
      %v403 = vld [vmem:[%s3 + $0x60] sm:$0xff]
      %v404 = vld [vmem:[%s3 + $0x68] sm:$0xff]
      %v405 = vld [vmem:[%s3 + $0x70] sm:$0xff]
      %v406 = vld [vmem:[%s3 + $0x78] sm:$0xff]
      %v407 = vld [vmem:[%s4] sm:$0x1]
      %v409 = vperm.slane %v407, 0
      %411 = vmatpush.msra.mxu0 %v406
      %412 = vmatpush.msra.mxu0 %v405
      %413 = vmatpush.msra.mxu0 %v404
      %414 = vmatpush.msra.mxu0 %v403
      %415 = vmatpush.msra.mxu0 %v402
      %416 = vmatpush.msra.mxu0 %v401
      %417 = vmatpush.msra.mxu0 %v400
      %418 = vmatpush.msra.mxu0 %v399
      %419 = vmatpush.msra.mxu0 %v398
      %420 = vmatpush.msra.mxu0 %v397
      %421 = vmatpush.msra.mxu0 %v396
      %422 = vmatpush.msra.mxu0 %v395
      %423 = vmatpush.msra.mxu0 %v394
      %424 = vmatpush.msra.mxu0 %v393
      %425 = vmatpush.msra.mxu0 %v392
      %426 = vmatpush.msra.mxu0 %v391
      %427 = vmatmul.f32.gmra.mxu0 %v387
      %v428 = vpop.f32.mrf.mxu0
      %v429 = vadd.f32 %v409, %v428
      %430 = vmatmul.f32.gmra.mxu0 %v388
      %v431 = vpop.f32.mrf.mxu0
      %v432 = vadd.f32 %v409, %v431
      %433 = vmatmul.f32.gmra.mxu0 %v389
      %v434 = vpop.f32.mrf.mxu0
      %v435 = vadd.f32 %v409, %v434
      %436 = vmatmul.f32.gmra.mxu0 %v390
      %v437 = vpop.f32.mrf.mxu0
      %v438 = vadd.f32 %v409, %v437
      %439 = vdwg.mxu0
      %v440 = vmax.f32 %v429, 0.0
      %v441 = vmax.f32 %v432, 0.0
      %v442 = vmax.f32 %v435, 0.0
      %v443 = vmax.f32 %v438, 0.0
      %v444 = vld [vmem:[%s5] sm:$0xff]
      %v445 = vld [vmem:[%s5 + $0x8] sm:$0xff]
      %v446 = vld [vmem:[%s5 + $0x10] sm:$0xff]
      %v447 = vld [vmem:[%s5 + $0x18] sm:$0xff]
      %v448 = vld [vmem:[%s5 + $0x20] sm:$0xff]
      %v449 = vld [vmem:[%s5 + $0x28] sm:$0xff]
      %v450 = vld [vmem:[%s5 + $0x30] sm:$0xff]
      %v451 = vld [vmem:[%s5 + $0x38] sm:$0xff]
      %v452 = vld [vmem:[%s5 + $0x40] sm:$0xff]
      %v453 = vld [vmem:[%s5 + $0x48] sm:$0xff]
      %v454 = vld [vmem:[%s5 + $0x50] sm:$0xff]
      %v455 = vld [vmem:[%s5 + $0x58] sm:$0xff]
      %v456 = vld [vmem:[%s5 + $0x60] sm:$0xff]
      %v457 = vld [vmem:[%s5 + $0x68] sm:$0xff]
      %v458 = vld [vmem:[%s5 + $0x70] sm:$0xff]
      %v459 = vld [vmem:[%s5 + $0x78] sm:$0xff]
      %v460 = vld [vmem:[%s6] sm:$0x1]
      %v462 = vperm.slane %v460, 0
      %464 = vmatpush.msra.mxu0 %v459
      %465 = vmatpush.msra.mxu0 %v458
      %466 = vmatpush.msra.mxu0 %v457
      %467 = vmatpush.msra.mxu0 %v456
      %468 = vmatpush.msra.mxu0 %v455
      %469 = vmatpush.msra.mxu0 %v454
      %470 = vmatpush.msra.mxu0 %v453
      %471 = vmatpush.msra.mxu0 %v452
      %472 = vmatpush.msra.mxu0 %v451
      %473 = vmatpush.msra.mxu0 %v450
      %474 = vmatpush.msra.mxu0 %v449
      %475 = vmatpush.msra.mxu0 %v448
      %476 = vmatpush.msra.mxu0 %v447
      %477 = vmatpush.msra.mxu0 %v446
      %478 = vmatpush.msra.mxu0 %v445
      %479 = vmatpush.msra.mxu0 %v444
      %480 = vmatmul.f32.gmra.mxu0 %v440
      %v481 = vpop.f32.mrf.mxu0
      %v482 = vadd.f32 %v462, %v481
      %483 = vmatmul.f32.gmra.mxu0 %v441
      %v484 = vpop.f32.mrf.mxu0
      %v485 = vadd.f32 %v462, %v484
      %486 = vmatmul.f32.gmra.mxu0 %v442
      %v487 = vpop.f32.mrf.mxu0
      %v488 = vadd.f32 %v462, %v487
      %489 = vmatmul.f32.gmra.mxu0 %v443
      %v490 = vpop.f32.mrf.mxu0
      %v491 = vadd.f32 %v462, %v490
      %492 = vdwg.mxu0
      %v493 = vmax.f32 %v482, 0.0
      %v494 = vmax.f32 %v485, 0.0
      %v495 = vmax.f32 %v488, 0.0
      %v496 = vmax.f32 %v491, 0.0
      %497 = vst [vmem:[%s283] sm:$0xff] %v493
      %498 = vst [vmem:[%s283 + $0x8] sm:$0xff] %v494
      %499 = vst [vmem:[%s283 + $0x10] sm:$0xff] %v495
      %500 = vst [vmem:[%s283 + $0x18] sm:$0xff] %v496
      %s501 = smul.u32 4, %s18
      %p502 = scmp.lt.s32.totalorder %s501, 7
      %s503 = scalar_select %p502, %s501, 7
      %s504 = smul.addr %s503, 8
      %s505 = scalar_lea.vmem %s7, %s504
      // Predicated region
      $region49: #{encoder_forward.1} parent=47 // pred_check
        %p506 = pneg %p188
      $region50: #{encoder_forward.1} parent=47 // pred_check_branch
        %508 = sbr.rel (%p506) target = $region52
      $region51: #{encoder_forward.1} parent=47 // pred_region
        %s509 = smul.u32 4, %s18
      $region52: #{encoder_forward.1} parent=47 // pred_fallthru
        _
    $region48: #{encoder_forward.1} parent=5 // pred_fallthru
      _
    %p510 = scmp.le.s32.totalorder 2, %s13
    // Predicated region
    $region53: #{encoder_forward.1} parent=5 // pred_check
      %p511 = pneg %p510
    $region54: #{encoder_forward.1} parent=5 // pred_check_branch
      %513 = sbr.rel (%p511) target = $region56
    $region55: #{encoder_forward.1} parent=5 // pred_region
      %s514 = ssub.s32 %s13, 2
      // Predicated region
      $region57: #{encoder_forward.1} parent=55 // pred_check
        %p515 = pneg %p194
      $region58: #{encoder_forward.1} parent=55 // pred_check_branch
        %517 = sbr.rel (%p515) target = $region60
      $region59: #{encoder_forward.1} parent=55 // pred_region
        %s518 = smul.u32 4, %s19
        %p519 = scmp.lt.s32.totalorder %s518, 7
        %s520 = scalar_select %p519, %s518, 7
        %s521 = smul.addr %s520, 8
        %s522 = scalar_lea.vmem %s7, %s521
      $region60: #{encoder_forward.1} parent=55 // pred_fallthru
        _
    $region56: #{encoder_forward.1} parent=5 // pred_fallthru
      _
  $region6: #{encoder_forward.1} parent=0 // loop_footer
    %s17 = sadd.s32 1, %s13
  $region7: #{encoder_forward.1} parent=0 // loop_footer_branch
    %12 = sbr.rel target = $region3
  $region8: #{encoder_forward.1} parent=0 // loop_exit
    _

</llo_original>
